<compile_context>
chip_gen: v7x
topology: tpu7x:2x2x1
jax: 0.10.0
libtpu: 0.0.40
codegen_flags: <defaults>
</compile_context>

<pallas_src>
import functools

import jax
import jax.numpy as jnp
from jax.experimental import pallas as pl
from jax.experimental.pallas import tpu as pltpu

_BN_EPS = 1e-5
# Double-buffered working-set budget for the streaming path (v5e-safe: its
# scoped-VMEM default is 16 MiB; v6e/v7x defaults are 32 MiB).
_PIPELINE_VMEM_BUDGET = 10 * 1024 * 1024
# Budget for the single-shot resident path (x + out + temporaries, 1x buffered).
_RESIDENT_VMEM_BUDGET = 8 * 1024 * 1024


# ---------------------------------------------------------------------------
# Resident fused path: one kernel, x read once, exact two-pass statistics.
# ---------------------------------------------------------------------------
def _fused_resident_kernel(*refs, use_bn: bool, n_total: float):
    if use_bn:
        x_ref, gamma_ref, beta_ref, wt_ref, b_ref, o_ref = refs
    else:
        x_ref, wt_ref, b_ref, o_ref = refs

    x = x_ref[...].astype(jnp.float32)                       # (B, C_in, L)

    if use_bn:
        inv_n = jnp.float32(1.0 / n_total)
        # Two-pass statistics: x is VMEM-resident, so the second traversal costs
        # no HBM traffic and avoids the E[x^2] - mean^2 cancellation hazard.
        mean = jnp.sum(jnp.sum(x, axis=2, keepdims=True), axis=0,
                       keepdims=True) * inv_n                 # (1, C_in, 1)
        d = x - mean                                          # (B, C_in, L)
        var = jnp.sum(jnp.sum(d * d, axis=2, keepdims=True), axis=0,
                      keepdims=True) * inv_n                  # (1, C_in, 1)
        scale = gamma_ref[...] * jax.lax.rsqrt(var + _BN_EPS)  # (1, C_in, 1)
        y = d * scale + beta_ref[...]                         # (B, C_in, L)
    else:
        y = x

    wt = wt_ref[...]                                          # (C_in, C_out, 1)
    c_in = y.shape[1]
    # Tiny contraction -> unrolled broadcast-FMA on the VPU.
    acc = wt[0:1] * y[:, 0:1, :]                              # (B, C_out, L)
    for c in range(1, c_in):
        acc = acc + wt[c:c + 1] * y[:, c:c + 1, :]
    o_ref[...] = (acc + b_ref[...]).astype(o_ref.dtype)


def _fused_resident(x, gamma3, beta3, wt3, b3, use_bn: bool):
    B, C_in, L = x.shape
    C_out = wt3.shape[1]
    kernel = functools.partial(_fused_resident_kernel, use_bn=use_bn,
                               n_total=float(B * L))
    args = (x, gamma3, beta3, wt3, b3) if use_bn else (x, wt3, b3)
    return pl.pallas_call(
        kernel,
        out_shape=jax.ShapeDtypeStruct((B, C_out, L), jnp.float32),
    )(*args)


# ---------------------------------------------------------------------------
# Streaming pass 1: per-batch partial sum / sum-of-squares (megacore-safe)
# ---------------------------------------------------------------------------
def _bn_stats_kernel(x_ref, sum_ref, sq_ref, *, tile_l: int, seq_len: int,
                     num_l: int):
    l = pl.program_id(1)

    @pl.when(l == 0)
    def _init():
        sum_ref[...] = jnp.zeros_like(sum_ref)
        sq_ref[...] = jnp.zeros_like(sq_ref)

    x = x_ref[...].astype(jnp.float32)                        # (C_in, tile_l)

    def _accumulate(xv):
        sum_ref[...] += jnp.sum(xv, axis=1, keepdims=True)
        sq_ref[...] += jnp.sum(xv * xv, axis=1, keepdims=True)

    if seq_len % tile_l == 0:
        _accumulate(x)
    else:
        # Masking only on the single ragged last tile; interior tiles skip the
        # iota/compare/select entirely.
        @pl.when(l < num_l - 1)
        def _interior():
            _accumulate(x)

        @pl.when(l == num_l - 1)
        def _last():
            valid = seq_len - l * tile_l
            lane = jax.lax.broadcasted_iota(jnp.int32, x.shape, 1)
            _accumulate(jnp.where(lane < valid, x, 0.0))


def _bn_stats(x, tile_l: int):
    B, C_in, L = x.shape
    n_l = pl.cdiv(L, tile_l)
    kernel = functools.partial(_bn_stats_kernel, tile_l=tile_l, seq_len=L,
                               num_l=n_l)
    return pl.pallas_call(
        kernel,
        grid=(B, n_l),
        in_specs=[
            pl.BlockSpec((pl.Squeezed(), C_in, tile_l), lambda b, l: (b, 0, l)),
        ],
        out_specs=[
            pl.BlockSpec((pl.Squeezed(), C_in, 1), lambda b, l: (b, 0, 0)),
            pl.BlockSpec((pl.Squeezed(), C_in, 1), lambda b, l: (b, 0, 0)),
        ],
        out_shape=[
            jax.ShapeDtypeStruct((B, C_in, 1), jnp.float32),
            jax.ShapeDtypeStruct((B, C_in, 1), jnp.float32),
        ],
        compiler_params=pltpu.CompilerParams(
            dimension_semantics=("parallel", "arbitrary")),
        cost_estimate=pl.CostEstimate(
            flops=3 * B * C_in * L,
            transcendentals=0,
            bytes_accessed=B * C_in * L * 4 + 2 * B * C_in * 4),
    )(x)


# ---------------------------------------------------------------------------
# Streaming pass 2: 1x1 conv with the BN fold computed in-kernel each step
# ---------------------------------------------------------------------------
def _conv_kernel(*refs, use_bn: bool, n_total: float):
    if use_bn:
        x_ref, s1_ref, s2_ref, gamma_ref, beta_ref, w_ref, b_ref, o_ref = refs
    else:
        x_ref, w_ref, b_ref, o_ref = refs

    x = x_ref[...].astype(jnp.float32)                        # (C_in, tile_l)
    if use_bn:
        inv_n = jnp.float32(1.0 / n_total)
        mean = s1_ref[...] * inv_n                            # (C_in, 1)
        # Single-pass variance; clamp guards cancellation-induced negatives.
        # TODO(synk): consider shifted accumulation for ill-conditioned features.
        var = jnp.maximum(s2_ref[...] * inv_n - mean * mean, 0.0)
        scale = gamma_ref[...] * jax.lax.rsqrt(var + _BN_EPS)  # rsqrt -> EUP
        shift = beta_ref[...] - scale * mean
        y = x * scale + shift
    else:
        y = x

    w = w_ref[...]                                            # (C_out, C_in)
    c_in = y.shape[0]
    if c_in <= 16:
        acc = w[:, 0:1] * y[0:1, :]
        for c in range(1, c_in):
            acc = acc + w[:, c:c + 1] * y[c:c + 1, :]
    else:
        acc = jnp.dot(w, y, preferred_element_type=jnp.float32)
    o_ref[...] = (acc + b_ref[...]).astype(o_ref.dtype)


def _conv_tiled(x, s1, s2, gamma2, beta2, w2d, b2d, tile_l: int, use_bn: bool):
    B, C_in, L = x.shape
    C_out = w2d.shape[0]
    n_l = pl.cdiv(L, tile_l)
    kernel = functools.partial(_conv_kernel, use_bn=use_bn, n_total=float(B * L))

    x_spec = pl.BlockSpec((pl.Squeezed(), C_in, tile_l), lambda b, l: (b, 0, l))
    const2 = lambda b, l: (0, 0)
    if use_bn:
        in_specs = [
            x_spec,
            pl.BlockSpec((C_in, 1), const2),       # s1
            pl.BlockSpec((C_in, 1), const2),       # s2
            pl.BlockSpec((C_in, 1), const2),       # gamma
            pl.BlockSpec((C_in, 1), const2),       # beta
            pl.BlockSpec((C_out, C_in), const2),   # w
            pl.BlockSpec((C_out, 1), const2),      # bias
        ]
        args = (x, s1, s2, gamma2, beta2, w2d, b2d)
    else:
        in_specs = [
            x_spec,
            pl.BlockSpec((C_out, C_in), const2),
            pl.BlockSpec((C_out, 1), const2),
        ]
        args = (x, w2d, b2d)

    return pl.pallas_call(
        kernel,
        grid=(B, n_l),
        in_specs=in_specs,
        out_specs=pl.BlockSpec((pl.Squeezed(), C_out, tile_l),
                               lambda b, l: (b, 0, l)),
        out_shape=jax.ShapeDtypeStruct((B, C_out, L), jnp.float32),
        compiler_params=pltpu.CompilerParams(
            dimension_semantics=("parallel", "parallel")),
        cost_estimate=pl.CostEstimate(
            flops=2 * B * C_out * C_in * L,
            transcendentals=0,
            bytes_accessed=(C_in + C_out) * B * L * 4),
    )(*args)


# ---------------------------------------------------------------------------
# Wrapper: forward pass of `Net`
# ---------------------------------------------------------------------------
def net_forward(num_feat, gamma, beta, weight, bias, *, use_bn: bool = True,
                force_tiled: bool = False, max_tile_l: int | None = None):
    """num_feat: (B, C_in, L) float32 -> (B, C_out, L) float32.

    Matches torch: Conv1d(kernel_size=1)(BatchNorm1d(num_feat)) with BatchNorm
    in training mode (biased batch statistics, eps=1e-5), or Identity when
    use_bn=False.
    """
    x = num_feat.astype(jnp.float32)
    B, C_in, L = x.shape
    C_out = weight.shape[0]

    w2d = weight.reshape(C_out, C_in).astype(jnp.float32)

    # Resident single-pass path: whole tensor (+ output + temps) fits in VMEM.
    resident_bytes = 2 * B * L * (C_in + C_out) * 4
    if (not force_tiled) and resident_bytes <= _RESIDENT_VMEM_BUDGET and C_in <= 64:
        wt3 = jnp.transpose(w2d)[:, :, None]                  # (C_in, C_out, 1)
        b3 = bias.reshape(1, C_out, 1).astype(jnp.float32)
        gamma3 = gamma.reshape(1, C_in, 1).astype(jnp.float32)
        beta3 = beta.reshape(1, C_in, 1).astype(jnp.float32)
        return _fused_resident(x, gamma3, beta3, wt3, b3, use_bn)

    # Streaming path: L tile sized from bytes/lane vs a v5e-safe double-buffered
    # VMEM budget, multiple of 128 lanes (lane-dense stores), capped at L.
    bytes_per_lane = (C_in + C_out) * 4
    tile_l = _PIPELINE_VMEM_BUDGET // (2 * bytes_per_lane)
    tile_l = max(128, (tile_l // 128) * 128)
    l_pad = ((L + 127) // 128) * 128
    tile_l = min(tile_l, l_pad)
    if max_tile_l is not None:
        tile_l = min(tile_l, max_tile_l)

    b2d = bias.reshape(C_out, 1).astype(jnp.float32)
    gamma2 = gamma.reshape(C_in, 1).astype(jnp.float32)
    beta2 = beta.reshape(C_in, 1).astype(jnp.float32)

    if use_bn:
        sums_b, sqs_b = _bn_stats(x, tile_l)                  # (B, C_in, 1) each
        s1 = jnp.sum(sums_b, axis=0)                          # (C_in, 1)
        s2 = jnp.sum(sqs_b, axis=0)
    else:
        s1 = s2 = None
    return _conv_tiled(x, s1, s2, gamma2, beta2, w2d, b2d, tile_l, use_bn)


# ---------------------------------------------------------------------------
# Pure-JAX reference
# ---------------------------------------------------------------------------
def _reference(num_feat, gamma, beta, weight, bias, *, use_bn: bool = True):
    x = num_feat.astype(jnp.float32)
    if use_bn:
        mean = jnp.mean(x, axis=(0, 2), keepdims=True)
        var = jnp.mean((x - mean) ** 2, axis=(0, 2), keepdims=True)
        x = (x - mean) / jnp.sqrt(var + _BN_EPS)
        x = x * gamma[None, :, None] + beta[None, :, None]
    w = weight.reshape(weight.shape[0], weight.shape[1])
    return jnp.einsum("oc,bcl->bol", w, x) + bias[None, :, None]


if __name__ == "__main__":
    num_feat_count = 4        # in_channels
    residual_channels = 8     # out_channels
    B, L = 2, 16

    key = jax.random.PRNGKey(0)
    kx, kg, kb, kw, kbias, kx2 = jax.random.split(key, 6)

    num_feat = jax.random.normal(kx, (B, num_feat_count, L), dtype=jnp.float32)
    gamma = 1.0 + 0.1 * jax.random.normal(kg, (num_feat_count,), dtype=jnp.float32)
    beta = 0.1 * jax.random.normal(kb, (num_feat_count,), dtype=jnp.float32)
    bound = 1.0 / jnp.sqrt(jnp.float32(num_feat_count))
    weight = jax.random.uniform(
        kw, (residual_channels, num_feat_count, 1),
        minval=-bound, maxval=bound, dtype=jnp.float32)
    bias = jax.random.uniform(
        kbias, (residual_channels,), minval=-bound, maxval=bound,
        dtype=jnp.float32)

    # 1) BatchNorm + conv, fused resident path.
    out = jax.block_until_ready(
        net_forward(num_feat, gamma, beta, weight, bias, use_bn=True))
    ref = _reference(num_feat, gamma, beta, weight, bias, use_bn=True)
    assert out.shape == (B, residual_channels, L), out.shape
    assert jnp.allclose(out, ref, atol=1e-4, rtol=1e-4), \
        float(jnp.max(jnp.abs(out - ref)))

    # 2) Identity path (use_bn=False), resident.
    out_id = jax.block_until_ready(
        net_forward(num_feat, gamma, beta, weight, bias, use_bn=False))
    ref_id = _reference(num_feat, gamma, beta, weight, bias, use_bn=False)
    assert jnp.allclose(out_id, ref_id, atol=1e-4, rtol=1e-4), \
        float(jnp.max(jnp.abs(out_id - ref_id)))

    # 3) Streaming path with a ragged last tile (mask under pl.when).
    L2 = 160
    num_feat2 = jax.random.normal(kx2, (B, num_feat_count, L2), dtype=jnp.float32)
    out2 = jax.block_until_ready(
        net_forward(num_feat2, gamma, beta, weight, bias,
                    use_bn=True, force_tiled=True, max_tile_l=128))
    ref2 = _reference(num_feat2, gamma, beta, weight, bias, use_bn=True)
    assert out2.shape == (B, residual_channels, L2), out2.shape
    assert jnp.allclose(out2, ref2, atol=1e-4, rtol=1e-4), \
        float(jnp.max(jnp.abs(out2 - ref2)))

    # 4) Streaming path, identity BN.
    out3 = jax.block_until_ready(
        net_forward(num_feat2, gamma, beta, weight, bias,
                    use_bn=False, force_tiled=True, max_tile_l=128))
    ref3 = _reference(num_feat2, gamma, beta, weight, bias, use_bn=False)
    assert jnp.allclose(out3, ref3, atol=1e-4, rtol=1e-4), \
        float(jnp.max(jnp.abs(out3 - ref3)))

    print("KERNEL_OK")
</pallas_src>

<mosaic_0001>
module attributes {stable_mosaic.version = 11 : i64} {
  func.func @_fused_resident_kernel(%arg0: memref<2x4x16xf32, #tpu.memory_space<vmem>>, %arg1: memref<1x4x1xf32, #tpu.memory_space<vmem>>, %arg2: memref<1x4x1xf32, #tpu.memory_space<vmem>>, %arg3: memref<4x8x1xf32, #tpu.memory_space<vmem>>, %arg4: memref<1x8x1xf32, #tpu.memory_space<vmem>>, %arg5: memref<2x8x16xf32, #tpu.memory_space<vmem>>) attributes {dimension_semantics = [], scalar_prefetch = 0 : i64, scratch_operands = 0 : i64, tpu.core_type = #tpu.core_type<tc>} {
    %c0 = arith.constant 0 : index
    %c0_0 = arith.constant 0 : index
    %c0_1 = arith.constant 0 : index
    %0 = vector.load %arg0[%c0, %c0_0, %c0_1] : memref<2x4x16xf32, #tpu.memory_space<vmem>>, vector<2x4x16xf32>
    %cst = arith.constant dense<0.000000e+00> : vector<2x4xf32>
    %1 = vector.multi_reduction <add>, %0, %cst [2] : vector<2x4x16xf32> to vector<2x4xf32>
    %2 = vector.shape_cast %1 : vector<2x4xf32> to vector<2x4x1xf32>
    %cst_2 = arith.constant dense<0.000000e+00> : vector<4x1xf32>
    %3 = vector.multi_reduction <add>, %2, %cst_2 [0] : vector<2x4x1xf32> to vector<4x1xf32>
    %4 = vector.shape_cast %3 : vector<4x1xf32> to vector<1x4x1xf32>
    %cst_3 = arith.constant 3.125000e-02 : f32
    %5 = vector.broadcast %cst_3 : f32 to vector<1x4x1xf32>
    %6 = arith.mulf %4, %5 : vector<1x4x1xf32>
    %7 = vector.broadcast %6 : vector<1x4x1xf32> to vector<2x4x16xf32>
    %8 = arith.subf %0, %7 : vector<2x4x16xf32>
    %9 = arith.mulf %8, %8 : vector<2x4x16xf32>
    %cst_4 = arith.constant dense<0.000000e+00> : vector<2x4xf32>
    %10 = vector.multi_reduction <add>, %9, %cst_4 [2] : vector<2x4x16xf32> to vector<2x4xf32>
    %11 = vector.shape_cast %10 : vector<2x4xf32> to vector<2x4x1xf32>
    %cst_5 = arith.constant dense<0.000000e+00> : vector<4x1xf32>
    %12 = vector.multi_reduction <add>, %11, %cst_5 [0] : vector<2x4x1xf32> to vector<4x1xf32>
    %13 = vector.shape_cast %12 : vector<4x1xf32> to vector<1x4x1xf32>
    %cst_6 = arith.constant 3.125000e-02 : f32
    %14 = vector.broadcast %cst_6 : f32 to vector<1x4x1xf32>
    %15 = arith.mulf %13, %14 : vector<1x4x1xf32>
    %c0_7 = arith.constant 0 : index
    %c0_8 = arith.constant 0 : index
    %c0_9 = arith.constant 0 : index
    %16 = vector.load %arg1[%c0_7, %c0_8, %c0_9] : memref<1x4x1xf32, #tpu.memory_space<vmem>>, vector<1x4x1xf32>
    %cst_10 = arith.constant 9.99999974E-6 : f32
    %17 = vector.broadcast %cst_10 : f32 to vector<1x4x1xf32>
    %18 = arith.addf %15, %17 : vector<1x4x1xf32>
    %19 = math.rsqrt %18 : vector<1x4x1xf32>
    %20 = arith.mulf %16, %19 : vector<1x4x1xf32>
    %21 = vector.broadcast %20 : vector<1x4x1xf32> to vector<2x4x16xf32>
    %22 = arith.mulf %8, %21 : vector<2x4x16xf32>
    %c0_11 = arith.constant 0 : index
    %c0_12 = arith.constant 0 : index
    %c0_13 = arith.constant 0 : index
    %23 = vector.load %arg2[%c0_11, %c0_12, %c0_13] : memref<1x4x1xf32, #tpu.memory_space<vmem>>, vector<1x4x1xf32>
    %24 = vector.broadcast %23 : vector<1x4x1xf32> to vector<2x4x16xf32>
    %25 = arith.addf %22, %24 : vector<2x4x16xf32>
    %c0_14 = arith.constant 0 : index
    %c0_15 = arith.constant 0 : index
    %c0_16 = arith.constant 0 : index
    %26 = vector.load %arg3[%c0_14, %c0_15, %c0_16] : memref<4x8x1xf32, #tpu.memory_space<vmem>>, vector<4x8x1xf32>
    %27 = vector.extract_strided_slice %26 {offsets = [0, 0, 0], sizes = [1, 8, 1], strides = [1, 1, 1]} : vector<4x8x1xf32> to vector<1x8x1xf32>
    %28 = vector.extract_strided_slice %25 {offsets = [0, 0, 0], sizes = [2, 1, 16], strides = [1, 1, 1]} : vector<2x4x16xf32> to vector<2x1x16xf32>
    %29 = vector.broadcast %27 : vector<1x8x1xf32> to vector<2x8x16xf32>
    %30 = vector.broadcast %28 : vector<2x1x16xf32> to vector<2x8x16xf32>
    %31 = arith.mulf %29, %30 : vector<2x8x16xf32>
    %32 = vector.extract_strided_slice %26 {offsets = [1, 0, 0], sizes = [1, 8, 1], strides = [1, 1, 1]} : vector<4x8x1xf32> to vector<1x8x1xf32>
    %33 = vector.extract_strided_slice %25 {offsets = [0, 1, 0], sizes = [2, 1, 16], strides = [1, 1, 1]} : vector<2x4x16xf32> to vector<2x1x16xf32>
    %34 = vector.broadcast %32 : vector<1x8x1xf32> to vector<2x8x16xf32>
    %35 = vector.broadcast %33 : vector<2x1x16xf32> to vector<2x8x16xf32>
    %36 = arith.mulf %34, %35 : vector<2x8x16xf32>
    %37 = arith.addf %31, %36 : vector<2x8x16xf32>
    %38 = vector.extract_strided_slice %26 {offsets = [2, 0, 0], sizes = [1, 8, 1], strides = [1, 1, 1]} : vector<4x8x1xf32> to vector<1x8x1xf32>
    %39 = vector.extract_strided_slice %25 {offsets = [0, 2, 0], sizes = [2, 1, 16], strides = [1, 1, 1]} : vector<2x4x16xf32> to vector<2x1x16xf32>
    %40 = vector.broadcast %38 : vector<1x8x1xf32> to vector<2x8x16xf32>
    %41 = vector.broadcast %39 : vector<2x1x16xf32> to vector<2x8x16xf32>
    %42 = arith.mulf %40, %41 : vector<2x8x16xf32>
    %43 = arith.addf %37, %42 : vector<2x8x16xf32>
    %44 = vector.extract_strided_slice %26 {offsets = [3, 0, 0], sizes = [1, 8, 1], strides = [1, 1, 1]} : vector<4x8x1xf32> to vector<1x8x1xf32>
    %45 = vector.extract_strided_slice %25 {offsets = [0, 3, 0], sizes = [2, 1, 16], strides = [1, 1, 1]} : vector<2x4x16xf32> to vector<2x1x16xf32>
    %46 = vector.broadcast %44 : vector<1x8x1xf32> to vector<2x8x16xf32>
    %47 = vector.broadcast %45 : vector<2x1x16xf32> to vector<2x8x16xf32>
    %48 = arith.mulf %46, %47 : vector<2x8x16xf32>
    %49 = arith.addf %43, %48 : vector<2x8x16xf32>
    %c0_17 = arith.constant 0 : index
    %c0_18 = arith.constant 0 : index
    %c0_19 = arith.constant 0 : index
    %50 = vector.load %arg4[%c0_17, %c0_18, %c0_19] : memref<1x8x1xf32, #tpu.memory_space<vmem>>, vector<1x8x1xf32>
    %51 = vector.broadcast %50 : vector<1x8x1xf32> to vector<2x8x16xf32>
    %52 = arith.addf %49, %51 : vector<2x8x16xf32>
    %c0_20 = arith.constant 0 : index
    %c0_21 = arith.constant 0 : index
    %c0_22 = arith.constant 0 : index
    %53 = vector.load %arg5[%c0_20, %c0_21, %c0_22] : memref<2x8x16xf32, #tpu.memory_space<vmem>>, vector<2x8x16xf32>
    tpu.vector_store %arg5[%c0_20, %c0_21, %c0_22], %52 {strides = array<i32>} : memref<2x8x16xf32, #tpu.memory_space<vmem>>, vector<2x8x16xf32>,
    return
  }
}

</mosaic_0001>

<llo_original>
// kernel: tpu_custom_call.1
$region0: #{tpu_custom_call.1}
  #allocation0 [shape = 'u32[]', space=smem, size = 0x4, offset = 0x4, fixed_abs, tag = 'smem constant byte address 0x4 - core index']
  #allocation1 [shape = 'u32[144,128]{1,0:T(1,128)}', space=vmem, size = 0x12000, scoped, tag = 'internal scratch']
  %s0 = inlined_call_operand.vmem [shape: f32[2,4,16], index: 0, kind: input, shape index: {}]
  %s1 = inlined_call_operand.vmem [shape: f32[1,4,1], index: 1, kind: input, shape index: {}]
  %s2 = inlined_call_operand.vmem [shape: f32[1,4,1], index: 2, kind: input, shape index: {}]
  %s3 = inlined_call_operand.vmem [shape: f32[4,8,1], index: 3, kind: input, shape index: {}]
  %s4 = inlined_call_operand.vmem [shape: f32[1,8,1], index: 4, kind: input, shape index: {}]
  %s5 = inlined_call_operand.hbm [shape: f32[2,8,16], index: 5, kind: output, shape index: {}]
  %s6 = sld [smem:[#allocation0]]
  $region30: #{tpu_custom_call.1} parent=0
    _
  %s8 = ssub.s32 1, %s6
  %s9 = scalar_select 0, %s8, %s6
  $region1: #{tpu_custom_call.1} parent=0
    #allocation2 [shape = 'u8[8192]{0}', space=vmem, size = 0x2000, scoped, tag = 'output window, operand 0, single buffered']
    #allocation3 [shape = 's32[1]{0}', space=sflag, size = 0x4, scoped, tag = 'scoped memory for tpu_custom_call.1']
    %10 = vsyncpa [#allocation3], 0
    // Predicated region
    $region2: #{tpu_custom_call.1} parent=1 // pred_check
      _
    $region3: #{tpu_custom_call.1} parent=1 // pred_check_branch
      %12 = sbr.rel (0) target = $region5
    $region4: #{tpu_custom_call.1} parent=1 // pred_region
      _
    $region5: #{tpu_custom_call.1} parent=1 // pred_fallthru
      _
    // Predicated region
    $region6: #{tpu_custom_call.1} parent=1 // pred_check
      _
    $region7: #{tpu_custom_call.1} parent=1 // pred_check_branch
      %14 = sbr.rel (0) target = $region9
    $region8: #{tpu_custom_call.1} parent=1 // pred_region
      _
    $region9: #{tpu_custom_call.1} parent=1 // pred_fallthru
      _
    // Predicated region
    $region10: #{tpu_custom_call.1} parent=1 // pred_check
      _
    $region11: #{tpu_custom_call.1} parent=1 // pred_check_branch
      %16 = sbr.rel (0) target = $region13
    $region12: #{tpu_custom_call.1} parent=1 // pred_region
      _
    $region13: #{tpu_custom_call.1} parent=1 // pred_fallthru
      _
    // Predicated region
    $region14: #{tpu_custom_call.1} parent=1 // pred_check
      _
    $region15: #{tpu_custom_call.1} parent=1 // pred_check_branch
      %18 = sbr.rel (0) target = $region17
    $region16: #{tpu_custom_call.1} parent=1 // pred_region
      _
    $region17: #{tpu_custom_call.1} parent=1 // pred_fallthru
      _
    // Predicated region
    $region18: #{tpu_custom_call.1} parent=1 // pred_check
      _
    $region19: #{tpu_custom_call.1} parent=1 // pred_check_branch
      %20 = sbr.rel (0) target = $region21
    $region20: #{tpu_custom_call.1} parent=1 // pred_region
      _
    $region21: #{tpu_custom_call.1} parent=1 // pred_fallthru
      _
    %v21 = vld [vmem:[%s0] sm:$0xf]
    %v22 = vld [vmem:[%s0 + $0x4] sm:$0xf]
    %vm23 = vcmask 125952
    %v24 = vsel %vm23, %v21, 0.0
    %25 = vadd.xlane.f32.xlu0 %v24
    %v26 = vpop.xlane.xlu0 %25
    %v27 = vsel %vm23, %v22, 0.0
    %28 = vadd.xlane.f32.xlu0 %v27
    %v29 = vpop.xlane.xlu0 %28
    %vm30 = vcmask 1043456
    %v31 = vsel %vm30, %v26, 0.0
    %v32 = vsel %vm30, %v29, 0.0
    %v33 = vadd.f32 %v31, %v32
    %v34 = vmul.f32 %v33, 0.03125
    %v35 = vsub.f32 %v21, %v34
    %v36 = vsub.f32 %v22, %v34
    %v37 = vmul.f32 %v35, %v35
    %v38 = vmul.f32 %v36, %v36
    %v39 = vsel %vm23, %v37, 0.0
    %40 = vadd.xlane.f32.xlu0 %v39
    %v41 = vpop.xlane.xlu0 %40
    %v42 = vsel %vm23, %v38, 0.0
    %43 = vadd.xlane.f32.xlu0 %v42
    %v44 = vpop.xlane.xlu0 %43
    %v45 = vsel %vm30, %v41, 0.0
    %v46 = vsel %vm30, %v44, 0.0
    %v47 = vadd.f32 %v45, %v46
    %v48 = vmul.f32 %v47, 0.03125
    %v49 = vld [vmem:[%s1] sm:$0xf]
    %v50 = vadd.f32 %v48, 1e-05
    %v51 = vrsqrt.pop %v50
    %v52 = vmul.f32 %v49, %v51
    %54 = vset.pattern.permute.xlu0 0
    %55 = vperm.xlu0 %54, %v52
    %v56 = vpop.permute.xlu0 %55
    %v58 = vmul.f32 %v35, %v56
    %v59 = vmul.f32 %v36, %v56
    %v60 = vld [vmem:[%s2] sm:$0xf]
    %62 = vset.pattern.permute.xlu0 0
    %63 = vperm.xlu0 %62, %v60
    %v64 = vpop.permute.xlu0 %63
    %v66 = vadd.f32 %v58, %v64
    %v67 = vadd.f32 %v59, %v64
    %v68 = vld [vmem:[%s3] sm:$0xff]
    %v69 = vld [vmem:[%s3 + $0x8] sm:$0xff]
    %v70 = vld [vmem:[%s3 + $0x10] sm:$0xff]
    %v71 = vld [vmem:[%s3 + $0x18] sm:$0xff]
    %73 = vset.pattern.permute.xlu0 0
    %74 = vperm.xlu0 %73, %v68
    %v75 = vpop.permute.xlu0 %74
    %v77 = vlaneseq
    %v78 = vshrl.u32 %v77, 7
    %v79 = vsub.s32 0, %v78
    %v80 = vrot.slane %v66, %v79
    %v81 = vlaneseq
    %v82 = vshrl.u32 %v81, 7
    %v83 = vsub.s32 0, %v82
    %v84 = vrot.slane %v67, %v83
    %v85 = vmul.f32 %v75, %v80
    %v86 = vmul.f32 %v75, %v84
    %88 = vset.pattern.permute.xlu0 0
    %89 = vperm.xlu0 %88, %v69
    %v90 = vpop.permute.xlu0 %89
    %v92 = vlaneseq
    %v93 = vshrl.u32 %v92, 7
    %v94 = vsub.s32 1, %v93
    %v95 = vrot.slane %v66, %v94
    %v96 = vlaneseq
    %v97 = vshrl.u32 %v96, 7
    %v98 = vsub.s32 1, %v97
    %v99 = vrot.slane %v67, %v98
    %v100 = vmul.f32 %v90, %v95
    %v101 = vmul.f32 %v90, %v99
    %v102 = vadd.f32 %v85, %v100
    %v103 = vadd.f32 %v86, %v101
    %105 = vset.pattern.permute.xlu0 0
    %106 = vperm.xlu0 %105, %v70
    %v107 = vpop.permute.xlu0 %106
    %v109 = vlaneseq
    %v110 = vshrl.u32 %v109, 7
    %v111 = vsub.s32 2, %v110
    %v112 = vrot.slane %v66, %v111
    %v113 = vlaneseq
    %v114 = vshrl.u32 %v113, 7
    %v115 = vsub.s32 2, %v114
    %v116 = vrot.slane %v67, %v115
    %v117 = vmul.f32 %v107, %v112
    %v118 = vmul.f32 %v107, %v116
    %v119 = vadd.f32 %v102, %v117
    %v120 = vadd.f32 %v103, %v118
    %122 = vset.pattern.permute.xlu0 0
    %123 = vperm.xlu0 %122, %v71
    %v124 = vpop.permute.xlu0 %123
    %v126 = vlaneseq
    %v127 = vshrl.u32 %v126, 7
    %v128 = vsub.s32 3, %v127
    %v129 = vrot.slane %v66, %v128
    %v130 = vlaneseq
    %v131 = vshrl.u32 %v130, 7
    %v132 = vsub.s32 3, %v131
    %v133 = vrot.slane %v67, %v132
    %v134 = vmul.f32 %v124, %v129
    %v135 = vmul.f32 %v124, %v133
    %v136 = vadd.f32 %v119, %v134
    %v137 = vadd.f32 %v120, %v135
    %v138 = vld [vmem:[%s4] sm:$0xff]
    %140 = vset.pattern.permute.xlu0 0
    %141 = vperm.xlu0 %140, %v138
    %v142 = vpop.permute.xlu0 %141
    %v144 = vadd.f32 %v136, %v142
    %v145 = vadd.f32 %v137, %v142
    %vm146 = vcmask 130048
    %147 = vst.msk [vmem:[#allocation2] sm:$0xff] %vm146, %v144
    %148 = vst.msk [vmem:[#allocation2 + $0x8] sm:$0xff] %vm146, %v145
    // Predicated region
    $region22: #{tpu_custom_call.1} parent=1 // pred_check
      _
    $region23: #{tpu_custom_call.1} parent=1 // pred_check_branch
      %150 = sbr.rel (0) target = $region25
    $region24: #{tpu_custom_call.1} parent=1 // pred_region
      %s152 = ssub.s32 256, 256
      %153 = vsyncadd [#allocation3], %s152
      %s154 = sshll.u32 [#allocation2], 4
      %s155 = int_to_ptr.vmem [resolvable:$true] %s154
      %160 = dma.vmem_to_hbm [thread:$0]  %s155, 256, %s5, [#allocation3], 128, 128, 8
    $region25: #{tpu_custom_call.1} parent=1 // pred_fallthru
      _
    // Predicated region
    $region26: #{tpu_custom_call.1} parent=1 // pred_check
      _
    $region27: #{tpu_custom_call.1} parent=1 // pred_check_branch
      %162 = sbr.rel (0) target = $region29
    $region28: #{tpu_custom_call.1} parent=1 // pred_region
      %163 = dma.done [#allocation3], 256
    $region29: #{tpu_custom_call.1} parent=1 // pred_fallthru
      _
    %164 = vsyncpa [#allocation3], 1

</llo_original>
